<compile_context>
chip_gen: v7x
topology: tpu7x:2x2x1
jax: 0.10.0
libtpu: 0.0.40
codegen_flags: <defaults>
</compile_context>

<pallas_src>
import math
import functools

import jax
import jax.numpy as jnp
import numpy as np
from jax.experimental import pallas as pl
from jax.experimental.pallas import tpu as pltpu


def _round_up(a, b):
    return -(-a // b) * b


def _vmem_capacity_bytes():
    try:
        cap = getattr(pltpu.get_tpu_info(), "vmem_capacity_bytes", None)
        if cap:
            return int(cap)
    except Exception:
        pass
    return 64 << 20        # conservative fallback = v7x per-TensorCore VMEM


def _polyphase_kernel(xm_ref, xl_ref, w_ref, b_ref, o_ref, *, L, J):
    # xm_ref: (1, TB, C_in)        rows [q0, q0+TB) of the channels-last input (index clamped)
    # xl_ref: (1, HB, C_in)        left halo: rows [q0-HB, q0)   (content irrelevant for q == 0)
    # w_ref : (J*C_in, S*C_outp)   folded taps: w[j*C_in+ci, p*C_outp+co] = W[ci, co, j*S+p]
    # b_ref : (1, S*C_outp)        bias tiled over phases (f32)
    # o_ref : (1, TB, S*C_outp)    S output phases of block-rows q0..q0+TB-1, lane-dense
    q = pl.program_id(1)
    TB = xm_ref.shape[1]
    HB = xl_ref.shape[1]
    q0 = q * TB

    xm = xm_ref[0]                                             # (TB, C_in)
    rm = jax.lax.broadcasted_iota(jnp.int32, (TB, 1), 0) + q0
    xm = jnp.where(rm < L, xm, jnp.zeros_like(xm))             # zero rows past the sequence end

    if J > 1:
        xl = xl_ref[0]                                         # (HB, C_in)
        rh = jax.lax.broadcasted_iota(jnp.int32, (HB, 1), 0) + (q0 - HB)
        xl = jnp.where((rh >= 0) & (rh < L), xl, jnp.zeros_like(xl))  # left pad + tail zeros
        x_cat = jnp.concatenate([xl, xm], axis=0)              # (HB+TB, C_in)
        # cols[j][r] = x[q0 + r - j]   (zero outside [0, L))
        cols = [xm] + [x_cat[HB - j:HB - j + TB, :] for j in range(1, J)]
        xf = jnp.concatenate(cols, axis=-1)                    # (TB, J*C_in)
    else:
        xf = xm

    acc = jnp.dot(xf, w_ref[...], preferred_element_type=jnp.float32)
    acc = acc + b_ref[...].astype(jnp.float32)
    o_ref[0] = acc.astype(o_ref.dtype)


def sconv_transpose1d(x, weight, bias, *, stride, causal=False, trim_right_ratio=1.0,
                      time_block=512, compute_dtype=jnp.bfloat16):
    """x: (B, C_in, L) NCW; weight: (C_in, C_out, K) (PyTorch ConvTranspose1d layout);
    bias: (C_out,). Returns (B, C_out, L*stride) — matches SConvTranspose1d.forward
    (norm='none')."""
    B, C_in, L = x.shape
    C_in_w, C_out, K = weight.shape
    assert C_in == C_in_w
    assert causal or trim_right_ratio == 1.0
    S = int(stride)
    padding_total = K - S
    if padding_total < 0:
        raise ValueError(f"SConvTranspose1d expects kernel_size >= stride (got K={K}, S={S}).")
    if causal:
        padding_right = math.ceil(padding_total * trim_right_ratio)
        padding_left = padding_total - padding_right
    else:
        padding_right = padding_total // 2
        padding_left = padding_total - padding_right
    T = L * S                       # output length after unpad1d
    P = padding_left
    J = -(-K // S)                  # taps per phase = ceil(K / S)

    # Lane-dense stores: if the output row is narrower than a vreg, pad channels so the
    # output tile's last dim is a multiple of 128 (padded channels are exact zeros).
    if S * C_out < 128:
        C_outp = _round_up(C_out, 128 // math.gcd(S, 128))
    else:
        C_outp = C_out

    # --- tiling: TB block-rows per grid step (each block-row = S output samples) ---
    HB = _round_up(max(J - 1, 1), 8)                 # halo rows, sublane aligned
    NB = L + J - 1                                   # block-rows covering the full conv
    TB = _round_up(min(max(int(time_block), HB), NB), HB)

    cbytes = jnp.dtype(compute_dtype).itemsize
    obytes = jnp.dtype(x.dtype).itemsize
    w_bytes = J * C_in * S * C_outp * cbytes

    def footprint(tb):                               # per-step VMEM estimate
        return (2 * tb * C_in * cbytes               # main input tile (double-buffered)
                + 2 * HB * C_in * cbytes             # halo tile (double-buffered)
                + 2 * w_bytes                        # weights (double-buffered even w/ const map)
                + 2 * S * C_outp * 4                 # bias
                + 2 * tb * S * C_outp * obytes       # output tile (double-buffered)
                + (2 * J + 1) * tb * C_in * cbytes   # masked / shifted / concat temporaries
                + HB * C_in * cbytes
                + tb * S * C_outp * 4)               # f32 accumulator

    vmem_cap = _vmem_capacity_bytes()
    budget = min((2 * vmem_cap) // 5, 48 << 20)      # ~25 MiB on v7x, 48 MiB on v5e/v6e
    while TB > HB and footprint(TB) > budget:
        TB = _round_up(TB // 2, HB)
    if B == 1:                                       # keep both v7x TensorCores busy
        while TB > HB and -(-NB // TB) < 2:
            TB = _round_up(TB // 2, HB)
    NQ = -(-NB // TB)
    nqh = TB // HB
    qmax_main = (L - 1) // TB

    # --- channels-last input; left zero-pad & ragged tail are handled inside the kernel ---
    # TODO(synk): the NCW<->NLC transposes exist only because the module boundary is PyTorch
    # NCW; a channels-last surrounding model would drop both full-activation transposes.
    xt = jnp.transpose(x, (0, 2, 1)).astype(compute_dtype)          # (B, L, C_in)

    # --- folded taps: w_fold[j*C_in+ci, p*C_outp+co] = W[ci, co, j*S+p] (zero past K / C_out) ---
    # TODO(synk): optional int8 (v5e/v6e) / fp8-e4m3 (v7x) weight path with per-channel scales.
    wt = jnp.transpose(weight, (2, 0, 1))                            # (K, C_in, C_out)
    wt = jnp.pad(wt, ((0, J * S - K), (0, 0), (0, C_outp - C_out)))  # (J*S, C_in, C_outp)
    w_fold = jnp.transpose(wt.reshape(J, S, C_in, C_outp), (0, 2, 1, 3))
    w_fold = w_fold.reshape(J * C_in, S * C_outp).astype(compute_dtype)
    b_fold = jnp.tile(jnp.pad(bias, (0, C_outp - C_out)), S).reshape(1, S * C_outp)
    b_fold = b_fold.astype(jnp.float32)

    kernel = functools.partial(_polyphase_kernel, L=L, J=J)
    vmem_limit = int(min(max(footprint(TB) + (8 << 20), 32 << 20),
                         (3 * vmem_cap) // 4, 96 << 20))
    out = pl.pallas_call(
        kernel,
        out_shape=jax.ShapeDtypeStruct((B, NQ * TB, S * C_outp), x.dtype),
        grid=(B, NQ),
        in_specs=[
            pl.BlockSpec((1, TB, C_in), lambda b, q: (b, jnp.minimum(q, qmax_main), 0)),
            pl.BlockSpec((1, HB, C_in), lambda b, q: (b, jnp.maximum(q * nqh - 1, 0), 0)),
            pl.BlockSpec((J * C_in, S * C_outp), lambda b, q: (0, 0)),
            pl.BlockSpec((1, S * C_outp), lambda b, q: (0, 0)),
        ],
        out_specs=pl.BlockSpec((1, TB, S * C_outp), lambda b, q: (b, q, 0)),
        compiler_params=pltpu.CompilerParams(
            dimension_semantics=("parallel", "parallel"),
            vmem_limit_bytes=vmem_limit),
    )(xt, xt, w_fold, b_fold)

    # phase interleave is a free row-major reshape; then asymmetric unpad, drop channel pad, NCW
    y = out.reshape(B, NQ * TB * S, C_outp)[:, P:P + T, :C_out]
    return jnp.transpose(y, (0, 2, 1))                               # (B, C_out, T)


def _ref_sconv_transpose1d(x, w, b, stride, causal=False, trim_right_ratio=1.0):
    """Straightforward numpy reference of ConvTranspose1d + unpad1d."""
    B, C_in, L = x.shape
    _, C_out, K = w.shape
    S = stride
    Lout = (L - 1) * S + K
    xn = np.asarray(x, np.float64)
    wn = np.asarray(w, np.float64)
    bn = np.asarray(b, np.float64)
    y = np.zeros((B, C_out, Lout), np.float64) + bn[None, :, None]
    for l in range(L):
        for k in range(K):
            y[:, :, l * S + k] += np.einsum('bi,io->bo', xn[:, :, l], wn[:, :, k])
    pt = K - S
    if causal:
        pr = math.ceil(pt * trim_right_ratio)
        pleft = pt - pr
    else:
        pr = pt // 2
        pleft = pt - pr
    return y[:, :, pleft:Lout - pr]


if __name__ == "__main__":
    key = jax.random.PRNGKey(0)

    def run_case(B, C_in, C_out, L, K, S, causal, trim, key):
        kx, kw, kb = jax.random.split(key, 3)
        x = jax.random.normal(kx, (B, C_in, L), jnp.float32)
        bound = 1.0 / math.sqrt(C_in * K)
        w = jax.random.uniform(kw, (C_in, C_out, K), jnp.float32, -bound, bound)
        b = jax.random.uniform(kb, (C_out,), jnp.float32, -bound, bound)
        out = sconv_transpose1d(x, w, b, stride=S, causal=causal, trim_right_ratio=trim)
        out = jax.block_until_ready(out)
        ref = _ref_sconv_transpose1d(x, w, b, S, causal=causal, trim_right_ratio=trim)
        assert out.shape == ref.shape, (out.shape, ref.shape)
        # bf16 MXU inputs with f32 accumulation -> bf16-level tolerance vs f64 reference
        np.testing.assert_allclose(np.asarray(out, np.float64), ref, rtol=3e-2, atol=3e-2)

    k1, k2, k3 = jax.random.split(key, 3)
    # Encodec-style decoder upsampling: kernel = 2 * stride, non-causal (symmetric unpad).
    run_case(B=2, C_in=4, C_out=6, L=16, K=8, S=4, causal=False, trim=1.0, key=k1)
    # Causal, K not a multiple of S: zero-padded phase taps, asymmetric trim, J=3 halo path.
    run_case(B=1, C_in=8, C_out=16, L=12, K=5, S=2, causal=True, trim=0.5, key=k2)
    # K == S (J=1, no halo, no channel padding), B == 1 forces a 2-step grid.
    run_case(B=1, C_in=16, C_out=40, L=20, K=4, S=4, causal=False, trim=1.0, key=k3)
    print("KERNEL_OK")
</pallas_src>

<mosaic_0001>
module attributes {stable_mosaic.version = 11 : i64} {
  func.func @_polyphase_kernel(%arg0: i32, %arg1: i32, %arg2: memref<1x24x4xbf16, #tpu.memory_space<vmem>>, %arg3: memref<1x8x4xbf16, #tpu.memory_space<vmem>>, %arg4: memref<8x128xbf16, #tpu.memory_space<vmem>>, %arg5: memref<1x128xf32, #tpu.memory_space<vmem>>, %arg6: memref<1x24x128xf32, #tpu.memory_space<vmem>>) attributes {dimension_semantics = [#tpu.dimension_semantics<parallel>, #tpu.dimension_semantics<parallel>], iteration_bounds = array<i64: 2, 1>, scalar_prefetch = 0 : i64, scratch_operands = 0 : i64, tpu.core_type = #tpu.core_type<tc>, window_params = [{transform_indices = @transform_0, window_bounds = array<i64: 1, 24, 4>}, {transform_indices = @transform_1, window_bounds = array<i64: 1, 8, 4>}, {pipeline_mode = #tpu.pipeline_mode<synchronous>, transform_indices = @transform_2, window_bounds = array<i64: 8, 128>}, {pipeline_mode = #tpu.pipeline_mode<synchronous>, transform_indices = @transform_3, window_bounds = array<i64: 1, 128>}, {transform_indices = @transform_4, window_bounds = array<i64: 1, 24, 128>}]} {
    %c24_i32 = arith.constant 24 : i32
    %0 = arith.muli %arg1, %c24_i32 : i32
    %c0 = arith.constant 0 : index
    %c0_0 = arith.constant 0 : index
    %c0_1 = arith.constant 0 : index
    %1 = vector.load %arg2[%c0, %c0_0, %c0_1] : memref<1x24x4xbf16, #tpu.memory_space<vmem>>, vector<1x24x4xbf16>
    %2 = vector.shape_cast %1 : vector<1x24x4xbf16> to vector<24x4xbf16>
    %3 = tpu.iota {dimensions = array<i32: 0>} : vector<24x1xi32>
    %4 = vector.broadcast %0 : i32 to vector<24x1xi32>
    %5 = arith.addi %3, %4 : vector<24x1xi32>
    %c16_i32 = arith.constant 16 : i32
    %6 = vector.broadcast %c16_i32 : i32 to vector<24x1xi32>
    %7 = arith.cmpi slt, %5, %6 : vector<24x1xi32>
    %cst = arith.constant 0.000000e+00 : bf16
    %8 = vector.broadcast %cst : bf16 to vector<24x4xbf16>
    %9 = vector.shape_cast %7 : vector<24x1xi1> to vector<24x1xi1>
    %10 = vector.broadcast %9 : vector<24x1xi1> to vector<24x4xi1>
    %11 = arith.select %10, %2, %8 : vector<24x4xi1>, vector<24x4xbf16>
    %c0_2 = arith.constant 0 : index
    %c0_3 = arith.constant 0 : index
    %c0_4 = arith.constant 0 : index
    %12 = vector.load %arg3[%c0_2, %c0_3, %c0_4] : memref<1x8x4xbf16, #tpu.memory_space<vmem>>, vector<1x8x4xbf16>
    %13 = vector.shape_cast %12 : vector<1x8x4xbf16> to vector<8x4xbf16>
    %14 = tpu.iota {dimensions = array<i32: 0>} : vector<8x1xi32>
    %c8_i32 = arith.constant 8 : i32
    %15 = arith.subi %0, %c8_i32 : i32
    %16 = vector.broadcast %15 : i32 to vector<8x1xi32>
    %17 = arith.addi %14, %16 : vector<8x1xi32>
    %c0_i32 = arith.constant 0 : i32
    %18 = vector.broadcast %c0_i32 : i32 to vector<8x1xi32>
    %19 = arith.cmpi sge, %17, %18 : vector<8x1xi32>
    %c16_i32_5 = arith.constant 16 : i32
    %20 = vector.broadcast %c16_i32_5 : i32 to vector<8x1xi32>
    %21 = arith.cmpi slt, %17, %20 : vector<8x1xi32>
    %22 = arith.andi %19, %21 : vector<8x1xi1>
    %cst_6 = arith.constant 0.000000e+00 : bf16
    %23 = vector.broadcast %cst_6 : bf16 to vector<8x4xbf16>
    %24 = vector.shape_cast %22 : vector<8x1xi1> to vector<8x1xi1>
    %25 = vector.broadcast %24 : vector<8x1xi1> to vector<8x4xi1>
    %26 = arith.select %25, %13, %23 : vector<8x4xi1>, vector<8x4xbf16>
    %27 = tpu.concatenate %26, %11 in 0 : vector<8x4xbf16>, vector<24x4xbf16> -> vector<32x4xbf16>
    %28 = vector.extract_strided_slice %27 {offsets = [7, 0], sizes = [24, 4], strides = [1, 1]} : vector<32x4xbf16> to vector<24x4xbf16>
    %29 = tpu.concatenate %11, %28 in 1 : vector<24x4xbf16>, vector<24x4xbf16> -> vector<24x8xbf16>
    %c0_7 = arith.constant 0 : index
    %c0_8 = arith.constant 0 : index
    %30 = vector.load %arg4[%c0_7, %c0_8] : memref<8x128xbf16, #tpu.memory_space<vmem>>, vector<8x128xbf16>
    %cst_9 = arith.constant dense<0.000000e+00> : vector<24x128xf32>
    %31 = tpu.matmul %29, %30, %cst_9 {dimension_numbers = #tpu.dot_dimension_numbers<[1], [0], [0], [1], [0, 0, 1, 1], [], []>} : vector<24x8xbf16>, vector<8x128xbf16>, vector<24x128xf32> -> vector<24x128xf32>
    %c0_10 = arith.constant 0 : index
    %c0_11 = arith.constant 0 : index
    %32 = vector.load %arg5[%c0_10, %c0_11] : memref<1x128xf32, #tpu.memory_space<vmem>>, vector<1x128xf32>
    %33 = vector.broadcast %32 : vector<1x128xf32> to vector<24x128xf32>
    %34 = arith.addf %31, %33 : vector<24x128xf32>
    %c0_12 = arith.constant 0 : index
    %c0_13 = arith.constant 0 : index
    %c0_14 = arith.constant 0 : index
    %35 = vector.load %arg6[%c0_12, %c0_13, %c0_14] : memref<1x24x128xf32, #tpu.memory_space<vmem>>, vector<1x24x128xf32>
    %36 = vector.shape_cast %35 : vector<1x24x128xf32> to vector<24x128xf32>
    %37 = vector.shape_cast %34 : vector<24x128xf32> to vector<1x24x128xf32>
    tpu.vector_store %arg6[%c0_12, %c0_13, %c0_14], %37 {strides = array<i32>} : memref<1x24x128xf32, #tpu.memory_space<vmem>>, vector<1x24x128xf32>,
    return
  }
  func.func @transform_0(%arg0: i32, %arg1: i32) -> (i32, i32, i32) {
    %c0_i32 = arith.constant 0 : i32
    %0 = arith.minsi %arg1, %c0_i32 : i32
    %c0_i32_0 = arith.constant 0 : i32
    %c0_i32_1 = arith.constant 0 : i32
    return %arg0, %0, %c0_i32_0 : i32, i32, i32
  }
  func.func @transform_1(%arg0: i32, %arg1: i32) -> (i32, i32, i32) {
    %c3_i32 = arith.constant 3 : i32
    %0 = arith.muli %arg1, %c3_i32 : i32
    %c1_i32 = arith.constant 1 : i32
    %1 = arith.subi %0, %c1_i32 : i32
    %c0_i32 = arith.constant 0 : i32
    %2 = arith.maxsi %1, %c0_i32 : i32
    %c0_i32_0 = arith.constant 0 : i32
    %c0_i32_1 = arith.constant 0 : i32
    return %arg0, %2, %c0_i32_0 : i32, i32, i32
  }
  func.func @transform_2(%arg0: i32, %arg1: i32) -> (i32, i32) {
    %c0_i32 = arith.constant 0 : i32
    %c0_i32_0 = arith.constant 0 : i32
    %c0_i32_1 = arith.constant 0 : i32
    return %c0_i32, %c0_i32_0 : i32, i32
  }
  func.func @transform_3(%arg0: i32, %arg1: i32) -> (i32, i32) {
    %c0_i32 = arith.constant 0 : i32
    %c0_i32_0 = arith.constant 0 : i32
    %c0_i32_1 = arith.constant 0 : i32
    return %c0_i32, %c0_i32_0 : i32, i32
  }
  func.func @transform_4(%arg0: i32, %arg1: i32) -> (i32, i32, i32) {
    %c0_i32 = arith.constant 0 : i32
    %c0_i32_0 = arith.constant 0 : i32
    return %arg0, %arg1, %c0_i32 : i32, i32, i32
  }
}

</mosaic_0001>

<llo_original>
// kernel: tpu_custom_call.1
$region0: #{tpu_custom_call.1}
  #allocation0 [shape = 'u32[]', space=smem, size = 0x4, offset = 0x4, fixed_abs, tag = 'smem constant byte address 0x4 - core index']
  #allocation1 [shape = 'u32[144,128]{1,0:T(1,128)}', space=vmem, size = 0x12000, scoped, tag = 'internal scratch']
  %s0 = inlined_call_operand.vmem [shape: bf16[2,16,4], index: 0, kind: input, shape index: {}]
  %s1 = inlined_call_operand.vmem [shape: bf16[2,16,4], index: 1, kind: input, shape index: {}]
  %s2 = inlined_call_operand.vmem [shape: bf16[8,128], index: 2, kind: input, shape index: {}]
  %s3 = inlined_call_operand.vmem [shape: f32[1,128], index: 3, kind: input, shape index: {}]
  %s4 = inlined_call_operand.hbm [shape: f32[2,24,128], index: 4, kind: output, shape index: {}]
  %s5 = sld [smem:[#allocation0]]
  $region49: #{tpu_custom_call.1} parent=0
    _
  %s7 = ssub.s32 1, %s5
  %s8 = scalar_select 0, %s7, %s5
  $region1: #{tpu_custom_call.1} parent=0
    #allocation2 [shape = 'u8[24576]{0}', space=vmem, size = 0x6000, scoped, tag = 'output window, operand 0']
    #allocation3 [shape = 's32[2]{0}', space=sflag, size = 0x8, scoped, tag = 'scoped memory for tpu_custom_call.1']
    %9 = vsyncpa [#allocation3], 0
    %s10 = scalar_lea.sflag [#allocation3], 1
    %11 = vsyncpa %s10, 0
    loop: start=0, step=1, limit=4
    $region2: #{tpu_custom_call.1} parent=1 // loop_pre_header
      _
    $region3: #{tpu_custom_call.1} parent=1 // loop_header
      %s13 = sphi 0, %s17
      %p14 = scmp.ge.s32.totalorder %s13, 4
      %s20 = sphi 0, %s32
      %s21 = sphi 0, %s28
      %s22 = sphi 0, %s20
      %s23 = sphi 0, %s21
      %s24 = sphi 0, %s22
      %s25 = sphi 0, %s23
      %s41 = sphi 0, %s43
      %s44 = sphi 0, %s41
      %s45 = sphi 0, %s44
      %s61 = sphi 0, %s45
      %s77 = sphi 0, %s79
      %s80 = sphi 0, %s77
      %s81 = sphi 0, %s80
      %s97 = sphi 0, %s81
      %s101 = sphi 0, %s101
      %s103 = sphi 0, %s101
      %s104 = sphi 0, %s103
      %s118 = sphi 0, %s104
      %s122 = sphi 0, %s122
      %s124 = sphi 0, %s122
      %s125 = sphi 0, %s124
      %s139 = sphi 0, %s125
      %s147 = sphi 0, %s149
      %s150 = sphi 0, %s147
      %s151 = sphi 0, %s150
      %s167 = sphi 0, %s151
    $region4: #{tpu_custom_call.1} parent=1 // loop_header_branch
      %16 = sbr.rel (%p14) target = $region8
    $region5: #{tpu_custom_call.1} parent=1 // loop_body
      %s18 = ssub.s32 %s13, 1
      %s19 = ssub.s32 %s13, 2
      %s26 = sadd.s32 1, %s21
      %p27 = scmp.ge.s32.totalorder %s26, 1
      %s28 = scalar_select %p27, 0, %s26
      %s29 = sadd.s32 1, %s20
      %s30 = scalar_select %p27, %s29, %s20
      %p31 = scmp.ge.s32.totalorder %s30, 2
      %s32 = scalar_select %p31, 0, %s30
      %p33 = scmp.lt.s32.totalorder %s21, 0
      %s34 = scalar_select %p33, %s21, 0
      %p35 = scmp.lt.s32.totalorder %s28, 0
      %s36 = scalar_select %p35, %s28, 0
      %s37 = ssub.s32 %s20, %s32
      %s38 = ssub.s32 %s34, %s36
      %s39 = sor.u32 %s37, %s38
      %p40 = scmp.eq.s32.totalorder %s39, 0
      %s42 = sadd.s32 %s41, 1
      %s43 = scalar_select %p40, %s41, %s42
      %p46 = pneg %p40
      %p47 = scmp.eq.s32.totalorder %s13, 1
      %p48 = por %p46, %p47
      %p49 = scmp.ne.s32.totalorder %s41, %s44
      %p50 = scmp.eq.s32.totalorder %s13, 0
      %p51 = por %p49, %p50
      %p52 = scmp.ne.s32.totalorder %s41, %s44
      %p53 = scmp.eq.s32.totalorder %s18, 1
      %p54 = por %p52, %p53
      %p55 = scmp.ne.s32.totalorder %s44, %s45
      %p56 = scmp.eq.s32.totalorder %s18, 0
      %p57 = por %p55, %p56
      %p58 = scmp.ne.s32.totalorder %s44, %s45
      %p59 = scmp.eq.s32.totalorder %s19, 1
      %p60 = por %p58, %p59
      %p62 = scmp.ne.s32.totalorder %s45, %s61
      %p63 = scmp.eq.s32.totalorder %s19, 0
      %p64 = por %p62, %p63
      %s65 = smul.u32 %s21, 3
      %s66 = ssub.s32 %s65, 1
      %p67 = scmp.gt.s32.totalorder %s66, 0
      %s68 = scalar_select %p67, %s66, 0
      %s69 = smul.u32 %s28, 3
      %s70 = ssub.s32 %s69, 1
      %p71 = scmp.gt.s32.totalorder %s70, 0
      %s72 = scalar_select %p71, %s70, 0
      %s73 = ssub.s32 %s20, %s32
      %s74 = ssub.s32 %s68, %s72
      %s75 = sor.u32 %s73, %s74
      %p76 = scmp.eq.s32.totalorder %s75, 0
      %s78 = sadd.s32 %s77, 1
      %s79 = scalar_select %p76, %s77, %s78
      %p82 = pneg %p76
      %p83 = scmp.eq.s32.totalorder %s13, 1
      %p84 = por %p82, %p83
      %p85 = scmp.ne.s32.totalorder %s77, %s80
      %p86 = scmp.eq.s32.totalorder %s13, 0
      %p87 = por %p85, %p86
      %p88 = scmp.ne.s32.totalorder %s77, %s80
      %p89 = scmp.eq.s32.totalorder %s18, 1
      %p90 = por %p88, %p89
      %p91 = scmp.ne.s32.totalorder %s80, %s81
      %p92 = scmp.eq.s32.totalorder %s18, 0
      %p93 = por %p91, %p92
      %p94 = scmp.ne.s32.totalorder %s80, %s81
      %p95 = scmp.eq.s32.totalorder %s19, 1
      %p96 = por %p94, %p95
      %p98 = scmp.ne.s32.totalorder %s81, %s97
      %p99 = scmp.eq.s32.totalorder %s19, 0
      %p100 = por %p98, %p99
      %s102 = sadd.s32 %s101, 1
      %p105 = scmp.eq.s32.totalorder %s13, 1
      %p106 = scmp.ne.s32.totalorder %s101, %s103
      %p107 = scmp.eq.s32.totalorder %s13, 0
      %p108 = por %p106, %p107
      %p109 = scmp.ne.s32.totalorder %s101, %s103
      %p110 = scmp.eq.s32.totalorder %s18, 1
      %p111 = por %p109, %p110
      %p112 = scmp.ne.s32.totalorder %s103, %s104
      %p113 = scmp.eq.s32.totalorder %s18, 0
      %p114 = por %p112, %p113
      %p115 = scmp.ne.s32.totalorder %s103, %s104
      %p116 = scmp.eq.s32.totalorder %s19, 1
      %p117 = por %p115, %p116
      %p119 = scmp.ne.s32.totalorder %s104, %s118
      %p120 = scmp.eq.s32.totalorder %s19, 0
      %p121 = por %p119, %p120
      %s123 = sadd.s32 %s122, 1
      %p126 = scmp.eq.s32.totalorder %s13, 1
      %p127 = scmp.ne.s32.totalorder %s122, %s124
      %p128 = scmp.eq.s32.totalorder %s13, 0
      %p129 = por %p127, %p128
      %p130 = scmp.ne.s32.totalorder %s122, %s124
      %p131 = scmp.eq.s32.totalorder %s18, 1
      %p132 = por %p130, %p131
      %p133 = scmp.ne.s32.totalorder %s124, %s125
      %p134 = scmp.eq.s32.totalorder %s18, 0
      %p135 = por %p133, %p134
      %p136 = scmp.ne.s32.totalorder %s124, %s125
      %p137 = scmp.eq.s32.totalorder %s19, 1
      %p138 = por %p136, %p137
      %p140 = scmp.ne.s32.totalorder %s125, %s139
      %p141 = scmp.eq.s32.totalorder %s19, 0
      %p142 = por %p140, %p141
      %s143 = ssub.s32 %s20, %s32
      %s144 = ssub.s32 %s21, %s28
      %s145 = sor.u32 %s143, %s144
      %p146 = scmp.eq.s32.totalorder %s145, 0
      %s148 = sadd.s32 %s147, 1
      %s149 = scalar_select %p146, %s147, %s148
      %p152 = pneg %p146
      %p153 = scmp.eq.s32.totalorder %s13, 1
      %p154 = por %p152, %p153
      %p155 = scmp.ne.s32.totalorder %s147, %s150
      %p156 = scmp.eq.s32.totalorder %s13, 0
      %p157 = por %p155, %p156
      %p158 = scmp.ne.s32.totalorder %s147, %s150
      %p159 = scmp.eq.s32.totalorder %s18, 1
      %p160 = por %p158, %p159
      %p161 = scmp.ne.s32.totalorder %s150, %s151
      %p162 = scmp.eq.s32.totalorder %s18, 0
      %p163 = por %p161, %p162
      %p164 = scmp.ne.s32.totalorder %s150, %s151
      %p165 = scmp.eq.s32.totalorder %s19, 1
      %p166 = por %p164, %p165
      %p168 = scmp.ne.s32.totalorder %s151, %s167
      %p169 = scmp.eq.s32.totalorder %s19, 0
      %p170 = por %p168, %p169
      %p171 = scmp.le.s32.totalorder 1, %s13
      %p172 = scmp.lt.s32.totalorder %s13, 3
      %p173 = pnand %p171, %p172
      %p174 = pneg %p173
      // Predicated region
      $region9: #{tpu_custom_call.1} parent=5 // pred_check
        _
      $region10: #{tpu_custom_call.1} parent=5 // pred_check_branch
        %176 = sbr.rel (%p173) target = $region12
      $region11: #{tpu_custom_call.1} parent=5 // pred_region
        %s177 = ssub.s32 %s13, 1
        // Predicated region
        $region13: #{tpu_custom_call.1} parent=11 // pred_check
          %p178 = pneg %p114
        $region14: #{tpu_custom_call.1} parent=11 // pred_check_branch
          %180 = sbr.rel (%p178) target = $region16
        $region15: #{tpu_custom_call.1} parent=11 // pred_region
          _
        $region16: #{tpu_custom_call.1} parent=11 // pred_fallthru
          _
        // Predicated region
        $region17: #{tpu_custom_call.1} parent=11 // pred_check
          %p181 = pneg %p135
        $region18: #{tpu_custom_call.1} parent=11 // pred_check_branch
          %183 = sbr.rel (%p181) target = $region20
        $region19: #{tpu_custom_call.1} parent=11 // pred_region
          _
        $region20: #{tpu_custom_call.1} parent=11 // pred_fallthru
          _
      $region12: #{tpu_custom_call.1} parent=5 // pred_fallthru
        _
      %p184 = scmp.lt.s32.totalorder %s13, 2
      // Predicated region
      $region21: #{tpu_custom_call.1} parent=5 // pred_check
        %p185 = pneg %p184
      $region22: #{tpu_custom_call.1} parent=5 // pred_check_branch
        %187 = sbr.rel (%p185) target = $region24
      $region23: #{tpu_custom_call.1} parent=5 // pred_region
        // Predicated region
        $region25: #{tpu_custom_call.1} parent=23 // pred_check
          %p188 = pneg %p51
        $region26: #{tpu_custom_call.1} parent=23 // pred_check_branch
          %190 = sbr.rel (%p188) target = $region28
        $region27: #{tpu_custom_call.1} parent=23 // pred_region
          %p191 = scmp.lt.s32.totalorder %s21, 0
          %s192 = scalar_select %p191, %s21, 0
          %s193 = smul.u32 3, %s192
          %s194 = ssub.s32 2, %s193
          %s195 = smul.u32 64, %s194
          %p196 = scmp.lt.s32.totalorder %s20, 1
          %s197 = scalar_select %p196, %s20, 1
          %p198 = scmp.lt.s32.totalorder %s193, 1
          %s199 = scalar_select %p198, %s193, 1
          %s200 = smul.addr %s197, 2
          %s201 = sadd.s32 %s199, %s200
          %s202 = smul.addr %s201, 4
          %s203 = scalar_lea.vmem %s0, %s202
          %p204 = scmp.lt.s32.totalorder %s21, 0
          %s205 = scalar_select %p204, %s21, 0
          %s206 = smul.u32 3, %s205
          %s207 = ssub.s32 2, %s206
          %s208 = smul.u32 64, %s207
        $region28: #{tpu_custom_call.1} parent=23 // pred_fallthru
          _
        // Predicated region
        $region29: #{tpu_custom_call.1} parent=23 // pred_check
          %p209 = pneg %p87
        $region30: #{tpu_custom_call.1} parent=23 // pred_check_branch
          %211 = sbr.rel (%p209) target = $region32
        $region31: #{tpu_custom_call.1} parent=23 // pred_region
          %s212 = smul.u32 %s21, 3
          %s213 = ssub.s32 %s212, 1
          %p214 = scmp.gt.s32.totalorder %s213, 0
          %s215 = scalar_select %p214, %s213, 0
          %p216 = scmp.lt.s32.totalorder %s20, 1
          %s217 = scalar_select %p216, %s20, 1
          %p218 = scmp.lt.s32.totalorder %s215, 1
          %s219 = scalar_select %p218, %s215, 1
          %s220 = smul.addr %s217, 2
          %s221 = sadd.s32 %s219, %s220
          %s222 = smul.addr %s221, 4
          %s223 = scalar_lea.vmem %s1, %s222
          %s224 = smul.u32 %s21, 3
          %s225 = ssub.s32 %s224, 1
          %p226 = scmp.gt.s32.totalorder %s225, 0
          %s227 = scalar_select %p226, %s225, 0
        $region32: #{tpu_custom_call.1} parent=23 // pred_fallthru
          _
      $region24: #{tpu_custom_call.1} parent=5 // pred_fallthru
        _
      %p228 = scmp.le.s32.totalorder 1, %s13
      %p229 = scmp.lt.s32.totalorder %s13, 3
      %p230 = pnand %p228, %p229
      %p231 = pneg %p230
      // Predicated region
      $region33: #{tpu_custom_call.1} parent=5 // pred_check
        _
      $region34: #{tpu_custom_call.1} parent=5 // pred_check_branch
        %233 = sbr.rel (%p230) target = $region36
      $region35: #{tpu_custom_call.1} parent=5 // pred_region
        %s234 = ssub.s32 %s13, 1
        %p235 = scmp.lt.s32.totalorder %s23, 0
        %s236 = scalar_select %p235, %s23, 0
        %s237 = smul.u32 3, %s236
        %s238 = ssub.s32 2, %s237
        %s239 = smul.u32 64, %s238
        %p240 = scmp.lt.s32.totalorder %s22, 1
        %s241 = scalar_select %p240, %s22, 1
        %p242 = scmp.lt.s32.totalorder %s237, 1
        %s243 = scalar_select %p242, %s237, 1
        %s244 = smul.addr %s241, 2
        %s245 = sadd.s32 %s243, %s244
        %s246 = smul.addr %s245, 4
        %s247 = scalar_lea.vmem %s0, %s246
        %p248 = pneg %p57
        %p249 = pneg %p54
        %s250 = smul.u32 %s23, 3
        %s251 = ssub.s32 %s250, 1
        %p252 = scmp.gt.s32.totalorder %s251, 0
        %s253 = scalar_select %p252, %s251, 0
        %p254 = scmp.lt.s32.totalorder %s22, 1
        %s255 = scalar_select %p254, %s22, 1
        %p256 = scmp.lt.s32.totalorder %s253, 1
        %s257 = scalar_select %p256, %s253, 1
        %s258 = smul.addr %s255, 2
        %s259 = sadd.s32 %s257, %s258
        %s260 = smul.addr %s259, 4
        %s261 = scalar_lea.vmem %s1, %s260
        %p262 = pneg %p93
        %p263 = pneg %p90
        %p264 = pneg %p114
        %p265 = pneg %p111
        %p266 = pneg %p135
        %p267 = pneg %p132
        %p268 = pneg %p163
        %p269 = pneg %p160
        %s270 = sand.u32 %s150, 1
        %s271 = scalar_lea.sflag [#allocation3], %s270
        %s272 = sand.u32 %s150, 1
        %s273 = smul.addr %s272, 24
        %s274 = scalar_lea.vmem [#allocation2], %s273
        %p275 = scmp.lt.s32.totalorder %s23, 0
        %s276 = scalar_select %p275, %s23, 0
        %s277 = smul.u32 3, %s276
        %s278 = ssub.s32 2, %s277
        %s279 = smul.u32 64, %s278
        %p280 = scmp.lt.s32.totalorder %s22, 1
        %s281 = scalar_select %p280, %s22, 1
        %p282 = scmp.lt.s32.totalorder %s277, 1
        %s283 = scalar_select %p282, %s277, 1
        %s284 = smul.addr %s281, 2
        %s285 = sadd.s32 %s283, %s284
        %s286 = smul.addr %s285, 4
        %s287 = scalar_lea.vmem %s0, %s286
        %p288 = scmp.lt.s32.totalorder %s23, 0
        %s289 = scalar_select %p288, %s23, 0
        %s290 = smul.u32 3, %s289
        %s291 = ssub.s32 2, %s290
        %s292 = smul.u32 64, %s291
        %s293 = smul.u32 %s23, 3
        %s294 = ssub.s32 %s293, 1
        %p295 = scmp.gt.s32.totalorder %s294, 0
        %s296 = scalar_select %p295, %s294, 0
        %p297 = scmp.lt.s32.totalorder %s22, 1
        %s298 = scalar_select %p297, %s22, 1
        %p299 = scmp.lt.s32.totalorder %s296, 1
        %s300 = scalar_select %p299, %s296, 1
        %s301 = smul.addr %s298, 2
        %s302 = sadd.s32 %s300, %s301
        %s303 = smul.addr %s302, 4
        %s304 = scalar_lea.vmem %s1, %s303
        %s305 = smul.u32 %s23, 3
        %s306 = ssub.s32 %s305, 1
        %p307 = scmp.gt.s32.totalorder %s306, 0
        %s308 = scalar_select %p307, %s306, 0
        %s309 = smul.u32 3, %s23
        %s311 = smul.u32 %s23, 24
        %v312 = vld [vmem:[%s287] sm:$0xf]
        %v313 = vld [vmem:[%s287 + $0x4] sm:$0xf]
        %v314 = vld [vmem:[%s287 + $0x8] sm:$0xf]
        %v315 = vlaneseq
        %v316 = vshrl.u32 %v315, 7
        %v317 = vadd.s32 %v316, 8
        %v318 = vadd.s32 %v316, 16
        %v319 = vstv %s311
        %v320 = vadd.s32 %v316, %v319
        %v321 = vadd.s32 %v317, %v319
        %v322 = vadd.s32 %v318, %v319
        %vm323 = vcmp.lt.s32.totalorder %v320, 16
        %vm324 = vcmp.lt.s32.totalorder %v321, 16
        %vm325 = vcmp.lt.s32.totalorder %v322, 16
        %v326 = vsel %vm323, 1, 0
        %v327 = vsel %vm324, 1, 0
        %v328 = vsel %vm325, 1, 0
        %vm329 = vcmp.eq.s32.totalorder %v326, 1
        %vm330 = vcmp.eq.s32.totalorder %v327, 1
        %vm331 = vcmp.eq.s32.totalorder %v328, 1
        %vm332 = vmpackc.low %vm329, %vm329
        %vm333 = vmpackc.low %vm330, %vm330
        %vm334 = vmpackc.low %vm331, %vm331
        %v335 = vsel %vm332, %v312, 0
        %v336 = vsel %vm333, %v313, 0
        %v337 = vsel %vm334, %v314, 0
        %v338 = vld [vmem:[%s304] sm:$0xf]
        %s339 = ssub.s32 %s311, 8
        %v340 = vstv %s339
        %v341 = vadd.s32 %v316, %v340
        %vm342 = vcmp.ge.s32.totalorder %v341, 0
        %vm343 = vcmp.lt.s32.totalorder %v341, 16
        %vm344 = vmand %vm342, %vm343
        %v345 = vsel %vm344, 1, 0
        %vm346 = vcmp.eq.s32.totalorder %v345, 1
        %vm347 = vmpackc.low %vm346, %vm346
        %v348 = vsel %vm347, %v338, 0
        %v352 = vunpack.c.l.b16 %v335
        %v353 = vunpack.c.l.b16 %v336
        %v354 = vunpack.c.l.b16 %v337
        %v355 = vpack.c.b16 %v352, %v352
        %v356 = vpack.c.b16 %v354, %v353
        %vm357 = vcmask 1043456
        %v360 = vsel %vm357, %v348, %v355
        %v361 = vpack.c.b16 %v353, %v352
        %v362 = vpack.c.b16 %v354, %v354
        %vm363 = vsmask.f32 4352
        %v364 = vshrl.u32 %v360, 16
        %v366 = vrot.slane %v364, 3
        %v367 = vshll.u32 %v360, 16
        %v369 = vrot.slane %v367, 4
        %v370 = vor.u32 %v366, %v369
        %v372 = vshrl.u32 %v356, 16
        %v374 = vrot.slane %v372, 3
        %v375 = vshll.u32 %v356, 16
        %v377 = vrot.slane %v375, 4
        %v378 = vor.u32 %v374, %v377
        %v379 = vsel %vm363, %v370, %v378
        %380 = vrot.lane.b32.xlu0 %v379, 4
        %v381 = vpop.permute.xlu0 %380
        %382 = vrot.lane.b32.xlu0 %v378, 4
        %v383 = vpop.permute.xlu0 %382
        %vm384 = vcmask 31744
        %v387 = vsel %vm384, %v361, %v381
        %v390 = vsel %vm384, %v362, %v383
        %v391 = vld [vmem:[%s2] sm:$0xf]
        %v392 = vld [vmem:[%s3] sm:$0x1]
        %v394 = vlaneseq
        %v395 = vshrl.u32 %v394, 7
        %v396 = vsub.s32 0, %v395
        %v397 = vrot.slane %v392, %v396
        %vm399 = vcmask 64512
        %v400 = vsel %vm399, %v387, 0
        %v402 = vsel %vm399, %v390, 0
        %v405 = vsel %vm357, %v391, 0
        %407 = vmatprep.subr.bf16.mxu0 0
        %408 = vmatpush1.bf16.msra.mxu0 %v405
        %409 = vmatprep.subr.bf16.mxu0 0
        %410 = vmatpush1.bf16.msra.mxu0 0
        %411 = vmatprep.subr.bf16.mxu0 0
        %412 = vmatpush1.bf16.msra.mxu0 0
        %413 = vmatprep.subr.bf16.mxu0 0
        %414 = vmatpush1.bf16.msra.mxu0 0
        %415 = vmatprep.subr.bf16.mxu0 0
        %416 = vmatpush1.bf16.msra.mxu0 0
        %417 = vmatprep.subr.bf16.mxu0 0
        %418 = vmatpush1.bf16.msra.mxu0 0
        %419 = vmatprep.subr.bf16.mxu0 0
        %420 = vmatpush1.bf16.msra.mxu0 0
        %421 = vmatprep.subr.bf16.mxu0 0
        %422 = vmatpush1.bf16.msra.mxu0 0
        %423 = vmatprep.subr.bf16.mxu0 0
        %424 = vmatpush1.bf16.msra.mxu0 0
        %425 = vmatprep.subr.bf16.mxu0 0
        %426 = vmatpush1.bf16.msra.mxu0 0
        %427 = vmatprep.subr.bf16.mxu0 0
        %428 = vmatpush1.bf16.msra.mxu0 0
        %429 = vmatprep.subr.bf16.mxu0 0
        %430 = vmatpush1.bf16.msra.mxu0 0
        %431 = vmatprep.subr.bf16.mxu0 0
        %432 = vmatpush1.bf16.msra.mxu0 0
        %433 = vmatprep.subr.bf16.mxu0 0
        %434 = vmatpush1.bf16.msra.mxu0 0
        %435 = vmatprep.subr.bf16.mxu0 0
        %436 = vmatpush1.bf16.msra.mxu0 0
        %437 = vmatprep.subr.bf16.mxu0 0
        %438 = vmatpush1.bf16.msra.mxu0 0
        %439 = vmatprep.mubr.bf16.mxu0 0
        %440 = vmatmul.mubr.bf16.gmra.mrb[0].mxu0 %v400
        %v441 = vpop.f32.mrb[0].mxu0
        %v442 = vadd.f32 %v397, %v441
        %v443 = vpop.f32.mrb[0].mxu0
        %v444 = vpop.f32.mrb[0].mxu0
        %v445 = vadd.f32 %v397, %v444
        %v446 = vpop.f32.mrb[0].mxu0
        %447 = vmatprep.mubr.bf16.mxu0 0
        %448 = vmatmul.mubr.bf16.gmra.mrb[0].mxu0 %v402
        %v449 = vpop.f32.mrb[0].mxu0
        %v450 = vadd.f32 %v397, %v449
        %v451 = vpop.f32.mrb[0].mxu0
        %v452 = vpop.f32.mrb[0].mxu0
        %v453 = vpop.f32.mrb[0].mxu0
        %454 = vdwg.mxu0
        %455 = vst [vmem:[%s274] sm:$0xff] %v442
        %456 = vst [vmem:[%s274 + $0x8] sm:$0xff] %v445
        %457 = vst [vmem:[%s274 + $0x10] sm:$0xff] %v450
        %s458 = sand.u32 %s150, 1
        %s459 = scalar_lea.sflag [#allocation3], %s458
        %s460 = sand.u32 %s150, 1
        %s461 = smul.addr %s460, 24
        %s462 = scalar_lea.vmem [#allocation2], %s461
        // Predicated region
        $region37: #{tpu_custom_call.1} parent=35 // pred_check
          %p463 = pneg %p160
        $region38: #{tpu_custom_call.1} parent=35 // pred_check_branch
          %465 = sbr.rel (%p463) target = $region40
        $region39: #{tpu_custom_call.1} parent=35 // pred_region
          %s466 = smul.u32 3, %s23
          %s468 = ssub.s32 384, 384
          %469 = vsyncadd %s459, %s468
          %s470 = smul.addr %s22, 3
          %s471 = sadd.s32 %s466, %s470
          %s472 = smul.addr %s471, 128
          %s473 = scalar_lea.hbm %s4, %s472
          %s474 = sshll.u32 %s462, 4
          %s475 = int_to_ptr.vmem [resolvable:$true] %s474
          %480 = dma.vmem_to_hbm [thread:$0]  %s475, 384, %s473, %s459, 128, 128, 8
        $region40: #{tpu_custom_call.1} parent=35 // pred_fallthru
          _
      $region36: #{tpu_custom_call.1} parent=5 // pred_fallthru
        _
      %p481 = scmp.le.s32.totalorder 2, %s13
      // Predicated region
      $region41: #{tpu_custom_call.1} parent=5 // pred_check
        %p482 = pneg %p481
      $region42: #{tpu_custom_call.1} parent=5 // pred_check_branch
        %484 = sbr.rel (%p482) target = $region44
      $region43: #{tpu_custom_call.1} parent=5 // pred_region
        %s485 = ssub.s32 %s13, 2
        // Predicated region
        $region45: #{tpu_custom_call.1} parent=43 // pred_check
          %p486 = pneg %p166
        $region46: #{tpu_custom_call.1} parent=43 // pred_check_branch
          %488 = sbr.rel (%p486) target = $region48
        $region47: #{tpu_custom_call.1} parent=43 // pred_region
          %s489 = sand.u32 %s151, 1
          %s490 = scalar_lea.sflag [#allocation3], %s489
          %s491 = sand.u32 %s151, 1
          %s492 = smul.addr %s491, 24
          %s493 = scalar_lea.vmem [#allocation2], %s492
          %494 = dma.done %s490, 384
        $region48: #{tpu_custom_call.1} parent=43 // pred_fallthru
          _
      $region44: #{tpu_custom_call.1} parent=5 // pred_fallthru
        _
    $region6: #{tpu_custom_call.1} parent=1 // loop_footer
      %s17 = sadd.s32 1, %s13
    $region7: #{tpu_custom_call.1} parent=1 // loop_footer_branch
      %12 = sbr.rel target = $region3
    $region8: #{tpu_custom_call.1} parent=1 // loop_exit
      _
    %495 = vsyncpa [#allocation3], 1
    %s496 = scalar_lea.sflag [#allocation3], 1
    %497 = vsyncpa %s496, 1

</llo_original>
